<compile_context>
chip_gen: v7x
topology: tpu7x:2x2x1
jax: 0.10.0
libtpu: 0.0.40
codegen_flags: <defaults>
</compile_context>

<pallas_src>
import jax
import jax.numpy as jnp
from jax.experimental import pallas as pl
from jax.experimental.pallas import tpu as pltpu

IN_DIM = 3            # x, y, turning_angle
AUG_DIM = IN_DIM + 1  # + ones row (layer-1 bias folded into W1)
OUT_DIM = 4           # u, v, rho, T
HIDDEN = 32           # per-model hidden width
FUSED = 2 * HIDDEN    # both models fused into one block-diagonal MLP
LANE = 128
PAD_GRAN = 512        # padding granularity for large N (decoupled from tile)
MAX_TILE = 8192       # max points per grid step (lane axis); modest VMEM everywhere


def _round_up(a, b):
    return (a + b - 1) // b * b


def _choose_tiling(n):
    """Return (n_pad, tn): lane-dense padding and points-per-grid-step."""
    if n <= 1024:
        # Small / overhead-dominated: single grid step, pad only to 128 lanes.
        n_pad = _round_up(max(n, LANE), LANE)
        return n_pad, n_pad
    # Larger problems: coarser pad granularity (decoupled from tile size),
    # >= 2 grid steps so both v7x TensorCores get work, tile <= MAX_TILE.
    n_pad = _round_up(n, PAD_GRAN)
    steps = max(2, -(-n_pad // MAX_TILE))
    while n_pad % steps or (n_pad // steps) % LANE:
        steps += 1
    return n_pad, n_pad // steps


def _silu(x):
    # silu(x) = x * sigmoid(x) = x * 0.5 * (1 + tanh(x/2))
    # -> one EUP push (tanh) per vreg instead of two (exp + reciprocal).
    return x * (0.5 * jnp.tanh(0.5 * x) + 0.5)


def _interface_kernel(x_ref, y_ref, a_ref, w1_ref, w2_ref, b2_ref,
                      w3_ref, b3_ref, o_ref, slab_ref):
    tn = x_ref.shape[-1]
    # Assemble the feature-major (4, TN) layer-1 slab in VMEM; row 3 = ones so
    # the layer-1 bias is folded into W1 (no separate broadcast-add).
    slab_ref[0:1, :] = x_ref[...]
    slab_ref[1:2, :] = y_ref[...]
    slab_ref[2:3, :] = a_ref[...]
    slab_ref[3:4, :] = jnp.ones((1, tn), jnp.float32)

    # Fused block-diagonal MLP; the interior-exterior subtraction is already
    # folded into W3/b3.  f32 MXU accumulation throughout.
    h = jnp.dot(w1_ref[...], slab_ref[...], preferred_element_type=jnp.float32)
    h = _silu(h)
    h = jnp.dot(w2_ref[...], h, preferred_element_type=jnp.float32) + b2_ref[...]
    h = _silu(h)
    o_ref[...] = (
        jnp.dot(w3_ref[...], h, preferred_element_type=jnp.float32) + b3_ref[...]
    )


def interface_forward(in_vars, fused_params):
    """in_vars: dict with 'x', 'y', 'turning_angle' each of shape [N, 1]."""
    n = in_vars["x"].shape[0]
    n_pad, tn = _choose_tiling(n)

    def prep(v):
        # (N,1) -> (1,N) is a free reshape (row-major contiguous); pad lanes
        # to a multiple of 128 so the kernel sees only unmasked lane tiles.
        v = v.reshape(1, n).astype(jnp.float32)
        if n_pad != n:
            v = jnp.pad(v, ((0, 0), (0, n_pad - n)))
        return v

    xs = prep(in_vars["x"])
    ys = prep(in_vars["y"])
    angs = prep(in_vars["turning_angle"])

    w1f, w2f, b2f, w3f, b3f = fused_params

    grid = (n_pad // tn,)
    pt = lambda i: (0, i)      # point-tiled operands
    const = lambda i: (0, 0)   # grid-invariant operands (weights / biases)

    out = pl.pallas_call(
        _interface_kernel,
        out_shape=jax.ShapeDtypeStruct((OUT_DIM, n_pad), jnp.float32),
        grid_spec=pltpu.PrefetchScalarGridSpec(
            num_scalar_prefetch=0,
            grid=grid,
            in_specs=[
                pl.BlockSpec((1, tn), pt),
                pl.BlockSpec((1, tn), pt),
                pl.BlockSpec((1, tn), pt),
                pl.BlockSpec((FUSED, AUG_DIM), const),
                pl.BlockSpec((FUSED, FUSED), const),
                pl.BlockSpec((FUSED, 1), const),
                pl.BlockSpec((OUT_DIM, FUSED), const),
                pl.BlockSpec((OUT_DIM, 1), const),
            ],
            out_specs=pl.BlockSpec((OUT_DIM, tn), pt),
            scratch_shapes=[pltpu.VMEM((AUG_DIM, tn), jnp.float32)],
        ),
        compiler_params=pltpu.CompilerParams(
            dimension_semantics=("parallel",),
        ),
    )(xs, ys, angs, w1f, w2f, b2f, w3f, b3f)

    out = out[:, :n]
    return {
        "interface_u": out[0].reshape(n, 1),
        "interface_v": out[1].reshape(n, 1),
        "interface_rho": out[2].reshape(n, 1),
        "interface_T": out[3].reshape(n, 1),
    }


def make_params(key):
    """Deterministic stacked parameters for [interior, exterior] MLPs."""
    ks = jax.random.split(key, 6)
    scale1 = 1.0 / jnp.sqrt(IN_DIM)
    scale2 = 1.0 / jnp.sqrt(HIDDEN)
    w1 = jax.random.normal(ks[0], (2, IN_DIM, HIDDEN), jnp.float32) * scale1
    b1 = jax.random.normal(ks[1], (2, 1, HIDDEN), jnp.float32) * 0.01
    w2 = jax.random.normal(ks[2], (2, HIDDEN, HIDDEN), jnp.float32) * scale2
    b2 = jax.random.normal(ks[3], (2, 1, HIDDEN), jnp.float32) * 0.01
    w3 = jax.random.normal(ks[4], (2, HIDDEN, OUT_DIM), jnp.float32) * scale2
    b3 = jax.random.normal(ks[5], (2, 1, OUT_DIM), jnp.float32) * 0.01
    return (w1, b1, w2, b2, w3, b3)


def fuse_params(params):
    """Fuse interior/exterior MLPs into one feature-major block-diagonal MLP.

    Layer 1: W1f = [[W1_int^T ; W1_ext^T], b1f]     -> (64, 4)  (bias folded: ones row in slab)
    Layer 2: W2f = blockdiag(W2_int^T, W2_ext^T)    -> (64, 64)
    Layer 3: W3f = [W3_int^T , -W3_ext^T]           -> (4, 64)  (subtraction folded in)
    """
    w1, b1, w2, b2, w3, b3 = params
    w1f = jnp.concatenate([w1[0].T, w1[1].T], axis=0)          # (64, 3)
    b1f = jnp.concatenate([b1[0].T, b1[1].T], axis=0)          # (64, 1)
    w1f = jnp.concatenate([w1f, b1f], axis=1)                  # (64, 4)
    z = jnp.zeros((HIDDEN, HIDDEN), jnp.float32)
    w2f = jnp.concatenate(
        [
            jnp.concatenate([w2[0].T, z], axis=1),
            jnp.concatenate([z, w2[1].T], axis=1),
        ],
        axis=0,
    )                                                          # (64, 64)
    b2f = jnp.concatenate([b2[0].T, b2[1].T], axis=0)          # (64, 1)
    w3f = jnp.concatenate([w3[0].T, -w3[1].T], axis=1)         # (4, 64)
    b3f = (b3[0] - b3[1]).T                                    # (4, 1)
    return (w1f, w2f, b2f, w3f, b3f)


def _reference(in_vars, params):
    """Pure-JAX reference of the same forward (unfused, for sanity checking)."""
    x = jnp.concatenate(
        [in_vars["x"], in_vars["y"], in_vars["turning_angle"]], axis=-1
    )
    w1, b1, w2, b2, w3, b3 = params

    def mlp(m):
        h = jax.nn.silu(x @ w1[m] + b1[m])
        h = jax.nn.silu(h @ w2[m] + b2[m])
        return h @ w3[m] + b3[m]

    out = mlp(0) - mlp(1)
    return {
        "interface_u": out[:, 0:1],
        "interface_v": out[:, 1:2],
        "interface_rho": out[:, 2:3],
        "interface_T": out[:, 3:4],
    }


if __name__ == "__main__":
    key = jax.random.PRNGKey(0)
    kp, kx, ky, ka = jax.random.split(key, 4)

    params = make_params(kp)
    fused = fuse_params(params)

    names = ("interface_u", "interface_v", "interface_rho", "interface_T")

    # Small point clouds (consistent with interface boundary points):
    #   16  -> single 128-lane tile
    #   200 -> single 256-lane tile (padding sliced off)
    #   1500 -> padded to 1536, 2 grid steps (exercises multi-tile path)
    for N in (16, 200, 1500):
        in_vars = {
            "x": jax.random.normal(kx, (N, 1), jnp.float32),
            "y": jax.random.normal(ky, (N, 1), jnp.float32),
            "turning_angle": jax.random.normal(ka, (N, 1), jnp.float32),
        }

        out = interface_forward(in_vars, fused)
        out = jax.tree_util.tree_map(jax.block_until_ready, out)

        ref = _reference(in_vars, params)
        for k in names:
            assert out[k].shape == (N, 1)
            assert jnp.allclose(out[k], ref[k], atol=1e-4, rtol=1e-4), (N, k)

    print("KERNEL_OK")
</pallas_src>

<mosaic_0001>
module attributes {stable_mosaic.version = 11 : i64} {
  func.func @_interface_kernel(%arg0: i32, %arg1: memref<1x128xf32, #tpu.memory_space<vmem>>, %arg2: memref<1x128xf32, #tpu.memory_space<vmem>>, %arg3: memref<1x128xf32, #tpu.memory_space<vmem>>, %arg4: memref<64x4xf32, #tpu.memory_space<vmem>>, %arg5: memref<64x64xf32, #tpu.memory_space<vmem>>, %arg6: memref<64x1xf32, #tpu.memory_space<vmem>>, %arg7: memref<4x64xf32, #tpu.memory_space<vmem>>, %arg8: memref<4x1xf32, #tpu.memory_space<vmem>>, %arg9: memref<4x128xf32, #tpu.memory_space<vmem>>, %arg10: memref<4x128xf32, #tpu.memory_space<vmem>>) attributes {dimension_semantics = [#tpu.dimension_semantics<parallel>], iteration_bounds = array<i64: 1>, scalar_prefetch = 0 : i64, scratch_operands = 1 : i64, tpu.core_type = #tpu.core_type<tc>, window_params = [{transform_indices = @transform_0, window_bounds = array<i64: 1, 128>}, {transform_indices = @transform_1, window_bounds = array<i64: 1, 128>}, {transform_indices = @transform_2, window_bounds = array<i64: 1, 128>}, {pipeline_mode = #tpu.pipeline_mode<synchronous>, transform_indices = @transform_3, window_bounds = array<i64: 64, 4>}, {pipeline_mode = #tpu.pipeline_mode<synchronous>, transform_indices = @transform_4, window_bounds = array<i64: 64, 64>}, {pipeline_mode = #tpu.pipeline_mode<synchronous>, transform_indices = @transform_5, window_bounds = array<i64: 64, 1>}, {pipeline_mode = #tpu.pipeline_mode<synchronous>, transform_indices = @transform_6, window_bounds = array<i64: 4, 64>}, {pipeline_mode = #tpu.pipeline_mode<synchronous>, transform_indices = @transform_7, window_bounds = array<i64: 4, 1>}, {transform_indices = @transform_8, window_bounds = array<i64: 4, 128>}]} {
    %c0 = arith.constant 0 : index
    %c0_0 = arith.constant 0 : index
    %0 = vector.load %arg1[%c0, %c0_0] : memref<1x128xf32, #tpu.memory_space<vmem>>, vector<1x128xf32>
    %c0_1 = arith.constant 0 : index
    %c0_2 = arith.constant 0 : index
    %1 = vector.load %arg10[%c0_1, %c0_2] : memref<4x128xf32, #tpu.memory_space<vmem>>, vector<1x128xf32>
    tpu.vector_store %arg10[%c0_1, %c0_2], %0 {strides = array<i32>} : memref<4x128xf32, #tpu.memory_space<vmem>>, vector<1x128xf32>,
    %c0_3 = arith.constant 0 : index
    %c0_4 = arith.constant 0 : index
    %2 = vector.load %arg2[%c0_3, %c0_4] : memref<1x128xf32, #tpu.memory_space<vmem>>, vector<1x128xf32>
    %c1 = arith.constant 1 : index
    %c0_5 = arith.constant 0 : index
    %3 = vector.load %arg10[%c1, %c0_5] : memref<4x128xf32, #tpu.memory_space<vmem>>, vector<1x128xf32>
    tpu.vector_store %arg10[%c1, %c0_5], %2 {strides = array<i32>} : memref<4x128xf32, #tpu.memory_space<vmem>>, vector<1x128xf32>,
    %c0_6 = arith.constant 0 : index
    %c0_7 = arith.constant 0 : index
    %4 = vector.load %arg3[%c0_6, %c0_7] : memref<1x128xf32, #tpu.memory_space<vmem>>, vector<1x128xf32>
    %c2 = arith.constant 2 : index
    %c0_8 = arith.constant 0 : index
    %5 = vector.load %arg10[%c2, %c0_8] : memref<4x128xf32, #tpu.memory_space<vmem>>, vector<1x128xf32>
    tpu.vector_store %arg10[%c2, %c0_8], %4 {strides = array<i32>} : memref<4x128xf32, #tpu.memory_space<vmem>>, vector<1x128xf32>,
    %cst = arith.constant 1.000000e+00 : f32
    %6 = vector.broadcast %cst : f32 to vector<1x128xf32>
    %c3 = arith.constant 3 : index
    %c0_9 = arith.constant 0 : index
    %7 = vector.load %arg10[%c3, %c0_9] : memref<4x128xf32, #tpu.memory_space<vmem>>, vector<1x128xf32>
    tpu.vector_store %arg10[%c3, %c0_9], %6 {strides = array<i32>} : memref<4x128xf32, #tpu.memory_space<vmem>>, vector<1x128xf32>,
    %c0_10 = arith.constant 0 : index
    %c0_11 = arith.constant 0 : index
    %8 = vector.load %arg4[%c0_10, %c0_11] : memref<64x4xf32, #tpu.memory_space<vmem>>, vector<64x4xf32>
    %c0_12 = arith.constant 0 : index
    %c0_13 = arith.constant 0 : index
    %9 = vector.load %arg10[%c0_12, %c0_13] : memref<4x128xf32, #tpu.memory_space<vmem>>, vector<4x128xf32>
    %cst_14 = arith.constant dense<0.000000e+00> : vector<64x128xf32>
    %10 = tpu.matmul %8, %9, %cst_14 {dimension_numbers = #tpu.dot_dimension_numbers<[1], [0], [0], [1], [0, 0, 1, 1], [], []>} : vector<64x4xf32>, vector<4x128xf32>, vector<64x128xf32> -> vector<64x128xf32>
    %cst_15 = arith.constant 5.000000e-01 : f32
    %11 = vector.broadcast %cst_15 : f32 to vector<64x128xf32>
    %12 = arith.mulf %11, %10 : vector<64x128xf32>
    %13 = math.tanh %12 : vector<64x128xf32>
    %cst_16 = arith.constant 5.000000e-01 : f32
    %14 = vector.broadcast %cst_16 : f32 to vector<64x128xf32>
    %15 = arith.mulf %14, %13 : vector<64x128xf32>
    %cst_17 = arith.constant 5.000000e-01 : f32
    %16 = vector.broadcast %cst_17 : f32 to vector<64x128xf32>
    %17 = arith.addf %15, %16 : vector<64x128xf32>
    %18 = arith.mulf %10, %17 : vector<64x128xf32>
    %c0_18 = arith.constant 0 : index
    %c0_19 = arith.constant 0 : index
    %19 = vector.load %arg5[%c0_18, %c0_19] : memref<64x64xf32, #tpu.memory_space<vmem>>, vector<64x64xf32>
    %cst_20 = arith.constant dense<0.000000e+00> : vector<64x128xf32>
    %20 = tpu.matmul %19, %18, %cst_20 {dimension_numbers = #tpu.dot_dimension_numbers<[1], [0], [0], [1], [0, 0, 1, 1], [], []>} : vector<64x64xf32>, vector<64x128xf32>, vector<64x128xf32> -> vector<64x128xf32>
    %c0_21 = arith.constant 0 : index
    %c0_22 = arith.constant 0 : index
    %21 = vector.load %arg6[%c0_21, %c0_22] : memref<64x1xf32, #tpu.memory_space<vmem>>, vector<64x1xf32>
    %22 = vector.broadcast %21 : vector<64x1xf32> to vector<64x128xf32>
    %23 = arith.addf %20, %22 : vector<64x128xf32>
    %cst_23 = arith.constant 5.000000e-01 : f32
    %24 = vector.broadcast %cst_23 : f32 to vector<64x128xf32>
    %25 = arith.mulf %24, %23 : vector<64x128xf32>
    %26 = math.tanh %25 : vector<64x128xf32>
    %cst_24 = arith.constant 5.000000e-01 : f32
    %27 = vector.broadcast %cst_24 : f32 to vector<64x128xf32>
    %28 = arith.mulf %27, %26 : vector<64x128xf32>
    %cst_25 = arith.constant 5.000000e-01 : f32
    %29 = vector.broadcast %cst_25 : f32 to vector<64x128xf32>
    %30 = arith.addf %28, %29 : vector<64x128xf32>
    %31 = arith.mulf %23, %30 : vector<64x128xf32>
    %c0_26 = arith.constant 0 : index
    %c0_27 = arith.constant 0 : index
    %32 = vector.load %arg7[%c0_26, %c0_27] : memref<4x64xf32, #tpu.memory_space<vmem>>, vector<4x64xf32>
    %cst_28 = arith.constant dense<0.000000e+00> : vector<4x128xf32>
    %33 = tpu.matmul %32, %31, %cst_28 {dimension_numbers = #tpu.dot_dimension_numbers<[1], [0], [0], [1], [0, 0, 1, 1], [], []>} : vector<4x64xf32>, vector<64x128xf32>, vector<4x128xf32> -> vector<4x128xf32>
    %c0_29 = arith.constant 0 : index
    %c0_30 = arith.constant 0 : index
    %34 = vector.load %arg8[%c0_29, %c0_30] : memref<4x1xf32, #tpu.memory_space<vmem>>, vector<4x1xf32>
    %35 = vector.broadcast %34 : vector<4x1xf32> to vector<4x128xf32>
    %36 = arith.addf %33, %35 : vector<4x128xf32>
    %c0_31 = arith.constant 0 : index
    %c0_32 = arith.constant 0 : index
    %37 = vector.load %arg9[%c0_31, %c0_32] : memref<4x128xf32, #tpu.memory_space<vmem>>, vector<4x128xf32>
    tpu.vector_store %arg9[%c0_31, %c0_32], %36 {strides = array<i32>} : memref<4x128xf32, #tpu.memory_space<vmem>>, vector<4x128xf32>,
    return
  }
  func.func @transform_0(%arg0: i32) -> (i32, i32) {
    %c0_i32 = arith.constant 0 : i32
    %c0_i32_0 = arith.constant 0 : i32
    return %c0_i32, %arg0 : i32, i32
  }
  func.func @transform_1(%arg0: i32) -> (i32, i32) {
    %c0_i32 = arith.constant 0 : i32
    %c0_i32_0 = arith.constant 0 : i32
    return %c0_i32, %arg0 : i32, i32
  }
  func.func @transform_2(%arg0: i32) -> (i32, i32) {
    %c0_i32 = arith.constant 0 : i32
    %c0_i32_0 = arith.constant 0 : i32
    return %c0_i32, %arg0 : i32, i32
  }
  func.func @transform_3(%arg0: i32) -> (i32, i32) {
    %c0_i32 = arith.constant 0 : i32
    %c0_i32_0 = arith.constant 0 : i32
    %c0_i32_1 = arith.constant 0 : i32
    return %c0_i32, %c0_i32_0 : i32, i32
  }
  func.func @transform_4(%arg0: i32) -> (i32, i32) {
    %c0_i32 = arith.constant 0 : i32
    %c0_i32_0 = arith.constant 0 : i32
    %c0_i32_1 = arith.constant 0 : i32
    return %c0_i32, %c0_i32_0 : i32, i32
  }
  func.func @transform_5(%arg0: i32) -> (i32, i32) {
    %c0_i32 = arith.constant 0 : i32
    %c0_i32_0 = arith.constant 0 : i32
    %c0_i32_1 = arith.constant 0 : i32
    return %c0_i32, %c0_i32_0 : i32, i32
  }
  func.func @transform_6(%arg0: i32) -> (i32, i32) {
    %c0_i32 = arith.constant 0 : i32
    %c0_i32_0 = arith.constant 0 : i32
    %c0_i32_1 = arith.constant 0 : i32
    return %c0_i32, %c0_i32_0 : i32, i32
  }
  func.func @transform_7(%arg0: i32) -> (i32, i32) {
    %c0_i32 = arith.constant 0 : i32
    %c0_i32_0 = arith.constant 0 : i32
    %c0_i32_1 = arith.constant 0 : i32
    return %c0_i32, %c0_i32_0 : i32, i32
  }
  func.func @transform_8(%arg0: i32) -> (i32, i32) {
    %c0_i32 = arith.constant 0 : i32
    %c0_i32_0 = arith.constant 0 : i32
    return %c0_i32, %arg0 : i32, i32
  }
}

</mosaic_0001>

<llo_original>
// kernel: tpu_custom_call.1
$region0: #{tpu_custom_call.1}
  #allocation0 [shape = 'u32[]', space=smem, size = 0x4, offset = 0x4, fixed_abs, tag = 'smem constant byte address 0x4 - core index']
  #allocation1 [shape = 'u32[144,128]{1,0:T(1,128)}', space=vmem, size = 0x12000, scoped, tag = 'internal scratch']
  #allocation2 [shape = 'f32[4,128]{1,0:T(4,128)}', space=vmem, size = 0x800, scoped, tag = 'scratch operand']
  %s0 = inlined_call_operand.vmem [shape: f32[1,128], index: 0, kind: input, shape index: {}]
  %s1 = inlined_call_operand.vmem [shape: f32[1,128], index: 1, kind: input, shape index: {}]
  %s2 = inlined_call_operand.vmem [shape: f32[1,128], index: 2, kind: input, shape index: {}]
  %s3 = inlined_call_operand.vmem [shape: f32[64,4], index: 3, kind: input, shape index: {}]
  %s4 = inlined_call_operand.vmem [shape: f32[64,64], index: 4, kind: input, shape index: {}]
  %s5 = inlined_call_operand.vmem [shape: f32[64,1], index: 5, kind: input, shape index: {}]
  %s6 = inlined_call_operand.vmem [shape: f32[4,64], index: 6, kind: input, shape index: {}]
  %s7 = inlined_call_operand.vmem [shape: f32[4,1], index: 7, kind: input, shape index: {}]
  %s8 = inlined_call_operand.hbm [shape: f32[4,128], index: 8, kind: output, shape index: {}]
  %s9 = sld [smem:[#allocation0]]
  $region42: #{tpu_custom_call.1} parent=0
    _
  %s11 = ssub.s32 1, %s9
  %s12 = scalar_select 0, %s11, %s9
  $region1: #{tpu_custom_call.1} parent=0
    #allocation3 [shape = 'u8[2048]{0}', space=vmem, size = 0x800, scoped, tag = 'output window, operand 0, single buffered']
    #allocation4 [shape = 's32[1]{0}', space=sflag, size = 0x4, scoped, tag = 'scoped memory for tpu_custom_call.1']
    %13 = vsyncpa [#allocation4], 0
    // Predicated region
    $region2: #{tpu_custom_call.1} parent=1 // pred_check
      _
    $region3: #{tpu_custom_call.1} parent=1 // pred_check_branch
      %15 = sbr.rel (0) target = $region5
    $region4: #{tpu_custom_call.1} parent=1 // pred_region
      _
    $region5: #{tpu_custom_call.1} parent=1 // pred_fallthru
      _
    // Predicated region
    $region6: #{tpu_custom_call.1} parent=1 // pred_check
      _
    $region7: #{tpu_custom_call.1} parent=1 // pred_check_branch
      %17 = sbr.rel (0) target = $region9
    $region8: #{tpu_custom_call.1} parent=1 // pred_region
      _
    $region9: #{tpu_custom_call.1} parent=1 // pred_fallthru
      _
    // Predicated region
    $region10: #{tpu_custom_call.1} parent=1 // pred_check
      _
    $region11: #{tpu_custom_call.1} parent=1 // pred_check_branch
      %19 = sbr.rel (0) target = $region13
    $region12: #{tpu_custom_call.1} parent=1 // pred_region
      _
    $region13: #{tpu_custom_call.1} parent=1 // pred_fallthru
      _
    // Predicated region
    $region14: #{tpu_custom_call.1} parent=1 // pred_check
      _
    $region15: #{tpu_custom_call.1} parent=1 // pred_check_branch
      %21 = sbr.rel (0) target = $region17
    $region16: #{tpu_custom_call.1} parent=1 // pred_region
      _
    $region17: #{tpu_custom_call.1} parent=1 // pred_fallthru
      _
    // Predicated region
    $region18: #{tpu_custom_call.1} parent=1 // pred_check
      _
    $region19: #{tpu_custom_call.1} parent=1 // pred_check_branch
      %23 = sbr.rel (0) target = $region21
    $region20: #{tpu_custom_call.1} parent=1 // pred_region
      _
    $region21: #{tpu_custom_call.1} parent=1 // pred_fallthru
      _
    // Predicated region
    $region22: #{tpu_custom_call.1} parent=1 // pred_check
      _
    $region23: #{tpu_custom_call.1} parent=1 // pred_check_branch
      %25 = sbr.rel (0) target = $region25
    $region24: #{tpu_custom_call.1} parent=1 // pred_region
      _
    $region25: #{tpu_custom_call.1} parent=1 // pred_fallthru
      _
    // Predicated region
    $region26: #{tpu_custom_call.1} parent=1 // pred_check
      _
    $region27: #{tpu_custom_call.1} parent=1 // pred_check_branch
      %27 = sbr.rel (0) target = $region29
    $region28: #{tpu_custom_call.1} parent=1 // pred_region
      _
    $region29: #{tpu_custom_call.1} parent=1 // pred_fallthru
      _
    // Predicated region
    $region30: #{tpu_custom_call.1} parent=1 // pred_check
      _
    $region31: #{tpu_custom_call.1} parent=1 // pred_check_branch
      %29 = sbr.rel (0) target = $region33
    $region32: #{tpu_custom_call.1} parent=1 // pred_region
      _
    $region33: #{tpu_custom_call.1} parent=1 // pred_fallthru
      _
    %v30 = vld [vmem:[%s0] sm:$0x1]
    %31 = vst [vmem:[#allocation2] sm:$0x1] %v30
    %v32 = vld [vmem:[%s1] sm:$0x1]
    %33 = vst [vmem:[#allocation2 + $0x1] sm:$0x1] %v32
    %v34 = vld [vmem:[%s2] sm:$0x1]
    %35 = vst [vmem:[#allocation2 + $0x2] sm:$0x1] %v34
    %36 = vst [vmem:[#allocation2 + $0x3] sm:$0x1] 1.0
    %v37 = vld [vmem:[%s3] sm:$0xff]
    %v38 = vld [vmem:[%s3 + $0x8] sm:$0xff]
    %v39 = vld [vmem:[%s3 + $0x10] sm:$0xff]
    %v40 = vld [vmem:[%s3 + $0x18] sm:$0xff]
    %v41 = vld [vmem:[%s3 + $0x20] sm:$0xff]
    %v42 = vld [vmem:[%s3 + $0x28] sm:$0xff]
    %v43 = vld [vmem:[%s3 + $0x30] sm:$0xff]
    %v44 = vld [vmem:[%s3 + $0x38] sm:$0xff]
    %v45 = vld [vmem:[#allocation2] sm:$0xf]
    %vm46 = vcmask 31744
    %v48 = vsel %vm46, %v37, 0
    %v51 = vsel %vm46, %v38, 0
    %v54 = vsel %vm46, %v39, 0
    %v57 = vsel %vm46, %v40, 0
    %v60 = vsel %vm46, %v41, 0
    %v63 = vsel %vm46, %v42, 0
    %v66 = vsel %vm46, %v43, 0
    %v69 = vsel %vm46, %v44, 0
    %vm71 = vcmask 1043456
    %v73 = vsel %vm71, %v45, 0
    %75 = vmatprep.subr.mxu0 0.0
    %76 = vmatpush1.msra.mxu0 %v73
    %77 = vmatprep.subr.mxu0 0.0
    %78 = vmatpush1.msra.mxu0 0.0
    %79 = vmatprep.subr.mxu0 0.0
    %80 = vmatpush1.msra.mxu0 0.0
    %81 = vmatprep.subr.mxu0 0.0
    %82 = vmatpush1.msra.mxu0 0.0
    %83 = vmatprep.subr.mxu0 0.0
    %84 = vmatpush1.msra.mxu0 0.0
    %85 = vmatprep.subr.mxu0 0.0
    %86 = vmatpush1.msra.mxu0 0.0
    %87 = vmatprep.subr.mxu0 0.0
    %88 = vmatpush1.msra.mxu0 0.0
    %89 = vmatprep.subr.mxu0 0.0
    %90 = vmatpush1.msra.mxu0 0.0
    %91 = vmatprep.subr.mxu0 0.0
    %92 = vmatpush1.msra.mxu0 0.0
    %93 = vmatprep.subr.mxu0 0.0
    %94 = vmatpush1.msra.mxu0 0.0
    %95 = vmatprep.subr.mxu0 0.0
    %96 = vmatpush1.msra.mxu0 0.0
    %97 = vmatprep.subr.mxu0 0.0
    %98 = vmatpush1.msra.mxu0 0.0
    %99 = vmatprep.subr.mxu0 0.0
    %100 = vmatpush1.msra.mxu0 0.0
    %101 = vmatprep.subr.mxu0 0.0
    %102 = vmatpush1.msra.mxu0 0.0
    %103 = vmatprep.subr.mxu0 0.0
    %104 = vmatpush1.msra.mxu0 0.0
    %105 = vmatprep.subr.mxu0 0.0
    %106 = vmatpush1.msra.mxu0 0.0
    %107 = vmatprep.subr.mxu0 0.0
    %108 = vmatpush1.msra.mxu0 0.0
    %109 = vmatprep.subr.mxu0 0.0
    %110 = vmatpush1.msra.mxu0 0.0
    %111 = vmatprep.subr.mxu0 0.0
    %112 = vmatpush1.msra.mxu0 0.0
    %113 = vmatprep.subr.mxu0 0.0
    %114 = vmatpush1.msra.mxu0 0.0
    %115 = vmatprep.subr.mxu0 0.0
    %116 = vmatpush1.msra.mxu0 0.0
    %117 = vmatprep.subr.mxu0 0.0
    %118 = vmatpush1.msra.mxu0 0.0
    %119 = vmatprep.subr.mxu0 0.0
    %120 = vmatpush1.msra.mxu0 0.0
    %121 = vmatprep.subr.mxu0 0.0
    %122 = vmatpush1.msra.mxu0 0.0
    %123 = vmatprep.subr.mxu0 0.0
    %124 = vmatpush1.msra.mxu0 0.0
    %125 = vmatprep.subr.mxu0 0.0
    %126 = vmatpush1.msra.mxu0 0.0
    %127 = vmatprep.subr.mxu0 0.0
    %128 = vmatpush1.msra.mxu0 0.0
    %129 = vmatprep.subr.mxu0 0.0
    %130 = vmatpush1.msra.mxu0 0.0
    %131 = vmatprep.subr.mxu0 0.0
    %132 = vmatpush1.msra.mxu0 0.0
    %133 = vmatprep.subr.mxu0 0.0
    %134 = vmatpush1.msra.mxu0 0.0
    %135 = vmatprep.subr.mxu0 0.0
    %136 = vmatpush1.msra.mxu0 0.0
    %137 = vmatprep.subr.mxu0 0.0
    %138 = vmatpush1.msra.mxu0 0.0
    %139 = vmatprep.mubr.f32.mxu0 0.0
    %140 = vmatmul.mubr.f32.gmra.mrb[0].mxu0 %v48
    %v141 = vpop.f32.mrb[0].mxu0
    %v142 = vadd.f32 0.0, %v141
    %v143 = vpop.f32.mrb[0].mxu0
    %144 = vmatprep.mubr.f32.mxu0 0.0
    %145 = vmatmul.mubr.f32.gmra.mrb[0].mxu0 %v51
    %v146 = vpop.f32.mrb[0].mxu0
    %v147 = vadd.f32 0.0, %v146
    %v148 = vpop.f32.mrb[0].mxu0
    %149 = vmatprep.mubr.f32.mxu0 0.0
    %150 = vmatmul.mubr.f32.gmra.mrb[0].mxu0 %v54
    %v151 = vpop.f32.mrb[0].mxu0
    %v152 = vadd.f32 0.0, %v151
    %v153 = vpop.f32.mrb[0].mxu0
    %154 = vmatprep.mubr.f32.mxu0 0.0
    %155 = vmatmul.mubr.f32.gmra.mrb[0].mxu0 %v57
    %v156 = vpop.f32.mrb[0].mxu0
    %v157 = vadd.f32 0.0, %v156
    %v158 = vpop.f32.mrb[0].mxu0
    %159 = vmatprep.mubr.f32.mxu0 0.0
    %160 = vmatmul.mubr.f32.gmra.mrb[0].mxu0 %v60
    %v161 = vpop.f32.mrb[0].mxu0
    %v162 = vadd.f32 0.0, %v161
    %v163 = vpop.f32.mrb[0].mxu0
    %164 = vmatprep.mubr.f32.mxu0 0.0
    %165 = vmatmul.mubr.f32.gmra.mrb[0].mxu0 %v63
    %v166 = vpop.f32.mrb[0].mxu0
    %v167 = vadd.f32 0.0, %v166
    %v168 = vpop.f32.mrb[0].mxu0
    %169 = vmatprep.mubr.f32.mxu0 0.0
    %170 = vmatmul.mubr.f32.gmra.mrb[0].mxu0 %v66
    %v171 = vpop.f32.mrb[0].mxu0
    %v172 = vadd.f32 0.0, %v171
    %v173 = vpop.f32.mrb[0].mxu0
    %174 = vmatprep.mubr.f32.mxu0 0.0
    %175 = vmatmul.mubr.f32.gmra.mrb[0].mxu0 %v69
    %v176 = vpop.f32.mrb[0].mxu0
    %v177 = vadd.f32 0.0, %v176
    %v178 = vpop.f32.mrb[0].mxu0
    %179 = vdwg.mxu0
    %v180 = vmul.f32 %v142, 0.5
    %v181 = vmul.f32 %v147, 0.5
    %v182 = vmul.f32 %v152, 0.5
    %v183 = vmul.f32 %v157, 0.5
    %v184 = vmul.f32 %v162, 0.5
    %v185 = vmul.f32 %v167, 0.5
    %v186 = vmul.f32 %v172, 0.5
    %v187 = vmul.f32 %v177, 0.5
    %v188 = vtanh.pop %v180
    %v189 = vtanh.pop %v181
    %v190 = vtanh.pop %v182
    %v191 = vtanh.pop %v183
    %v192 = vtanh.pop %v184
    %v193 = vtanh.pop %v185
    %v194 = vtanh.pop %v186
    %v195 = vtanh.pop %v187
    %v196 = vmul.f32 %v188, 0.5
    %v197 = vmul.f32 %v189, 0.5
    %v198 = vmul.f32 %v190, 0.5
    %v199 = vmul.f32 %v191, 0.5
    %v200 = vmul.f32 %v192, 0.5
    %v201 = vmul.f32 %v193, 0.5
    %v202 = vmul.f32 %v194, 0.5
    %v203 = vmul.f32 %v195, 0.5
    %v204 = vadd.f32 %v196, 0.5
    %v205 = vadd.f32 %v197, 0.5
    %v206 = vadd.f32 %v198, 0.5
    %v207 = vadd.f32 %v199, 0.5
    %v208 = vadd.f32 %v200, 0.5
    %v209 = vadd.f32 %v201, 0.5
    %v210 = vadd.f32 %v202, 0.5
    %v211 = vadd.f32 %v203, 0.5
    %v212 = vmul.f32 %v142, %v204
    %v213 = vmul.f32 %v147, %v205
    %v214 = vmul.f32 %v152, %v206
    %v215 = vmul.f32 %v157, %v207
    %v216 = vmul.f32 %v162, %v208
    %v217 = vmul.f32 %v167, %v209
    %v218 = vmul.f32 %v172, %v210
    %v219 = vmul.f32 %v177, %v211
    %v220 = vld [vmem:[%s4] sm:$0xff]
    %v221 = vld [vmem:[%s4 + $0x8] sm:$0xff]
    %v222 = vld [vmem:[%s4 + $0x10] sm:$0xff]
    %v223 = vld [vmem:[%s4 + $0x18] sm:$0xff]
    %v224 = vld [vmem:[%s4 + $0x20] sm:$0xff]
    %v225 = vld [vmem:[%s4 + $0x28] sm:$0xff]
    %v226 = vld [vmem:[%s4 + $0x30] sm:$0xff]
    %v227 = vld [vmem:[%s4 + $0x38] sm:$0xff]
    %v228 = vld [vmem:[%s5] sm:$0xff]
    %v229 = vld [vmem:[%s5 + $0x8] sm:$0xff]
    %v230 = vld [vmem:[%s5 + $0x10] sm:$0xff]
    %v231 = vld [vmem:[%s5 + $0x18] sm:$0xff]
    %v232 = vld [vmem:[%s5 + $0x20] sm:$0xff]
    %v233 = vld [vmem:[%s5 + $0x28] sm:$0xff]
    %v234 = vld [vmem:[%s5 + $0x30] sm:$0xff]
    %v235 = vld [vmem:[%s5 + $0x38] sm:$0xff]
    %237 = vset.pattern.permute.xlu0 0
    %238 = vperm.xlu0 %237, %v228
    %v239 = vpop.permute.xlu0 %238
    %242 = vset.pattern.permute.xlu0 0
    %243 = vperm.xlu0 %242, %v229
    %v244 = vpop.permute.xlu0 %243
    %247 = vset.pattern.permute.xlu0 0
    %248 = vperm.xlu0 %247, %v230
    %v249 = vpop.permute.xlu0 %248
    %252 = vset.pattern.permute.xlu0 0
    %253 = vperm.xlu0 %252, %v231
    %v254 = vpop.permute.xlu0 %253
    %257 = vset.pattern.permute.xlu0 0
    %258 = vperm.xlu0 %257, %v232
    %v259 = vpop.permute.xlu0 %258
    %262 = vset.pattern.permute.xlu0 0
    %263 = vperm.xlu0 %262, %v233
    %v264 = vpop.permute.xlu0 %263
    %267 = vset.pattern.permute.xlu0 0
    %268 = vperm.xlu0 %267, %v234
    %v269 = vpop.permute.xlu0 %268
    %272 = vset.pattern.permute.xlu0 0
    %273 = vperm.xlu0 %272, %v235
    %v274 = vpop.permute.xlu0 %273
    %vm276 = vcmask 523264
    %v278 = vsel %vm276, %v220, 0
    %v281 = vsel %vm276, %v221, 0
    %v284 = vsel %vm276, %v222, 0
    %v287 = vsel %vm276, %v223, 0
    %v290 = vsel %vm276, %v224, 0
    %v293 = vsel %vm276, %v225, 0
    %v296 = vsel %vm276, %v226, 0
    %v299 = vsel %vm276, %v227, 0
    %301 = vmatprep.subr.mxu0 0.0
    %302 = vmatpush1.msra.mxu0 %v212
    %303 = vmatprep.subr.mxu0 0.0
    %304 = vmatpush1.msra.mxu0 %v213
    %305 = vmatprep.subr.mxu0 0.0
    %306 = vmatpush1.msra.mxu0 %v214
    %307 = vmatprep.subr.mxu0 0.0
    %308 = vmatpush1.msra.mxu0 %v215
    %309 = vmatprep.subr.mxu0 0.0
    %310 = vmatpush1.msra.mxu0 %v216
    %311 = vmatprep.subr.mxu0 0.0
    %312 = vmatpush1.msra.mxu0 %v217
    %313 = vmatprep.subr.mxu0 0.0
    %314 = vmatpush1.msra.mxu0 %v218
    %315 = vmatprep.subr.mxu0 0.0
    %316 = vmatpush1.msra.mxu0 %v219
    %317 = vmatprep.subr.mxu0 0.0
    %318 = vmatpush1.msra.mxu0 0.0
    %319 = vmatprep.subr.mxu0 0.0
    %320 = vmatpush1.msra.mxu0 0.0
    %321 = vmatprep.subr.mxu0 0.0
    %322 = vmatpush1.msra.mxu0 0.0
    %323 = vmatprep.subr.mxu0 0.0
    %324 = vmatpush1.msra.mxu0 0.0
    %325 = vmatprep.subr.mxu0 0.0
    %326 = vmatpush1.msra.mxu0 0.0
    %327 = vmatprep.subr.mxu0 0.0
    %328 = vmatpush1.msra.mxu0 0.0
    %329 = vmatprep.subr.mxu0 0.0
    %330 = vmatpush1.msra.mxu0 0.0
    %331 = vmatprep.subr.mxu0 0.0
    %332 = vmatpush1.msra.mxu0 0.0
    %333 = vmatprep.subr.mxu0 0.0
    %334 = vmatpush1.msra.mxu0 0.0
    %335 = vmatprep.subr.mxu0 0.0
    %336 = vmatpush1.msra.mxu0 0.0
    %337 = vmatprep.subr.mxu0 0.0
    %338 = vmatpush1.msra.mxu0 0.0
    %339 = vmatprep.subr.mxu0 0.0
    %340 = vmatpush1.msra.mxu0 0.0
    %341 = vmatprep.subr.mxu0 0.0
    %342 = vmatpush1.msra.mxu0 0.0
    %343 = vmatprep.subr.mxu0 0.0
    %344 = vmatpush1.msra.mxu0 0.0
    %345 = vmatprep.subr.mxu0 0.0
    %346 = vmatpush1.msra.mxu0 0.0
    %347 = vmatprep.subr.mxu0 0.0
    %348 = vmatpush1.msra.mxu0 0.0
    %349 = vmatprep.subr.mxu0 0.0
    %350 = vmatpush1.msra.mxu0 0.0
    %351 = vmatprep.subr.mxu0 0.0
    %352 = vmatpush1.msra.mxu0 0.0
    %353 = vmatprep.subr.mxu0 0.0
    %354 = vmatpush1.msra.mxu0 0.0
    %355 = vmatprep.subr.mxu0 0.0
    %356 = vmatpush1.msra.mxu0 0.0
    %357 = vmatprep.subr.mxu0 0.0
    %358 = vmatpush1.msra.mxu0 0.0
    %359 = vmatprep.subr.mxu0 0.0
    %360 = vmatpush1.msra.mxu0 0.0
    %361 = vmatprep.subr.mxu0 0.0
    %362 = vmatpush1.msra.mxu0 0.0
    %363 = vmatprep.subr.mxu0 0.0
    %364 = vmatpush1.msra.mxu0 0.0
    %365 = vmatprep.mubr.f32.mxu0 0.0
    %366 = vmatmul.mubr.f32.gmra.mrb[0].mxu0 %v278
    %v367 = vpop.f32.mrb[0].mxu0
    %v368 = vadd.f32 %v239, %v367
    %v369 = vpop.f32.mrb[0].mxu0
    %370 = vmatprep.mubr.f32.mxu0 0.0
    %371 = vmatmul.mubr.f32.gmra.mrb[0].mxu0 %v281
    %v372 = vpop.f32.mrb[0].mxu0
    %v373 = vadd.f32 %v244, %v372
    %v374 = vpop.f32.mrb[0].mxu0
    %375 = vmatprep.mubr.f32.mxu0 0.0
    %376 = vmatmul.mubr.f32.gmra.mrb[0].mxu0 %v284
    %v377 = vpop.f32.mrb[0].mxu0
    %v378 = vadd.f32 %v249, %v377
    %v379 = vpop.f32.mrb[0].mxu0
    %380 = vmatprep.mubr.f32.mxu0 0.0
    %381 = vmatmul.mubr.f32.gmra.mrb[0].mxu0 %v287
    %v382 = vpop.f32.mrb[0].mxu0
    %v383 = vadd.f32 %v254, %v382
    %v384 = vpop.f32.mrb[0].mxu0
    %385 = vmatprep.mubr.f32.mxu0 0.0
    %386 = vmatmul.mubr.f32.gmra.mrb[0].mxu0 %v290
    %v387 = vpop.f32.mrb[0].mxu0
    %v388 = vadd.f32 %v259, %v387
    %v389 = vpop.f32.mrb[0].mxu0
    %390 = vmatprep.mubr.f32.mxu0 0.0
    %391 = vmatmul.mubr.f32.gmra.mrb[0].mxu0 %v293
    %v392 = vpop.f32.mrb[0].mxu0
    %v393 = vadd.f32 %v264, %v392
    %v394 = vpop.f32.mrb[0].mxu0
    %395 = vmatprep.mubr.f32.mxu0 0.0
    %396 = vmatmul.mubr.f32.gmra.mrb[0].mxu0 %v296
    %v397 = vpop.f32.mrb[0].mxu0
    %v398 = vadd.f32 %v269, %v397
    %v399 = vpop.f32.mrb[0].mxu0
    %400 = vmatprep.mubr.f32.mxu0 0.0
    %401 = vmatmul.mubr.f32.gmra.mrb[0].mxu0 %v299
    %v402 = vpop.f32.mrb[0].mxu0
    %v403 = vadd.f32 %v274, %v402
    %v404 = vpop.f32.mrb[0].mxu0
    %405 = vdwg.mxu0
    %v406 = vmul.f32 %v368, 0.5
    %v407 = vmul.f32 %v373, 0.5
    %v408 = vmul.f32 %v378, 0.5
    %v409 = vmul.f32 %v383, 0.5
    %v410 = vmul.f32 %v388, 0.5
    %v411 = vmul.f32 %v393, 0.5
    %v412 = vmul.f32 %v398, 0.5
    %v413 = vmul.f32 %v403, 0.5
    %v414 = vtanh.pop %v406
    %v415 = vtanh.pop %v407
    %v416 = vtanh.pop %v408
    %v417 = vtanh.pop %v409
    %v418 = vtanh.pop %v410
    %v419 = vtanh.pop %v411
    %v420 = vtanh.pop %v412
    %v421 = vtanh.pop %v413
    %v422 = vmul.f32 %v414, 0.5
    %v423 = vmul.f32 %v415, 0.5
    %v424 = vmul.f32 %v416, 0.5
    %v425 = vmul.f32 %v417, 0.5
    %v426 = vmul.f32 %v418, 0.5
    %v427 = vmul.f32 %v419, 0.5
    %v428 = vmul.f32 %v420, 0.5
    %v429 = vmul.f32 %v421, 0.5
    %v430 = vadd.f32 %v422, 0.5
    %v431 = vadd.f32 %v423, 0.5
    %v432 = vadd.f32 %v424, 0.5
    %v433 = vadd.f32 %v425, 0.5
    %v434 = vadd.f32 %v426, 0.5
    %v435 = vadd.f32 %v427, 0.5
    %v436 = vadd.f32 %v428, 0.5
    %v437 = vadd.f32 %v429, 0.5
    %v438 = vmul.f32 %v368, %v430
    %v439 = vmul.f32 %v373, %v431
    %v440 = vmul.f32 %v378, %v432
    %v441 = vmul.f32 %v383, %v433
    %v442 = vmul.f32 %v388, %v434
    %v443 = vmul.f32 %v393, %v435
    %v444 = vmul.f32 %v398, %v436
    %v445 = vmul.f32 %v403, %v437
    %v446 = vld [vmem:[%s6] sm:$0xf]
    %v447 = vld [vmem:[%s7] sm:$0xf]
    %449 = vset.pattern.permute.xlu0 0
    %450 = vperm.xlu0 %449, %v447
    %v451 = vpop.permute.xlu0 %450
    %v454 = vsel %vm276, %v446, 0
    %456 = vmatprep.subr.mxu0 0.0
    %457 = vmatpush1.msra.mxu0 %v438
    %458 = vmatprep.subr.mxu0 0.0
    %459 = vmatpush1.msra.mxu0 %v439
    %460 = vmatprep.subr.mxu0 0.0
    %461 = vmatpush1.msra.mxu0 %v440
    %462 = vmatprep.subr.mxu0 0.0
    %463 = vmatpush1.msra.mxu0 %v441
    %464 = vmatprep.subr.mxu0 0.0
    %465 = vmatpush1.msra.mxu0 %v442
    %466 = vmatprep.subr.mxu0 0.0
    %467 = vmatpush1.msra.mxu0 %v443
    %468 = vmatprep.subr.mxu0 0.0
    %469 = vmatpush1.msra.mxu0 %v444
    %470 = vmatprep.subr.mxu0 0.0
    %471 = vmatpush1.msra.mxu0 %v445
    %472 = vmatprep.subr.mxu0 0.0
    %473 = vmatpush1.msra.mxu0 0.0
    %474 = vmatprep.subr.mxu0 0.0
    %475 = vmatpush1.msra.mxu0 0.0
    %476 = vmatprep.subr.mxu0 0.0
    %477 = vmatpush1.msra.mxu0 0.0
    %478 = vmatprep.subr.mxu0 0.0
    %479 = vmatpush1.msra.mxu0 0.0
    %480 = vmatprep.subr.mxu0 0.0
    %481 = vmatpush1.msra.mxu0 0.0
    %482 = vmatprep.subr.mxu0 0.0
    %483 = vmatpush1.msra.mxu0 0.0
    %484 = vmatprep.subr.mxu0 0.0
    %485 = vmatpush1.msra.mxu0 0.0
    %486 = vmatprep.subr.mxu0 0.0
    %487 = vmatpush1.msra.mxu0 0.0
    %488 = vmatprep.subr.mxu0 0.0
    %489 = vmatpush1.msra.mxu0 0.0
    %490 = vmatprep.subr.mxu0 0.0
    %491 = vmatpush1.msra.mxu0 0.0
    %492 = vmatprep.subr.mxu0 0.0
    %493 = vmatpush1.msra.mxu0 0.0
    %494 = vmatprep.subr.mxu0 0.0
    %495 = vmatpush1.msra.mxu0 0.0
    %496 = vmatprep.subr.mxu0 0.0
    %497 = vmatpush1.msra.mxu0 0.0
    %498 = vmatprep.subr.mxu0 0.0
    %499 = vmatpush1.msra.mxu0 0.0
    %500 = vmatprep.subr.mxu0 0.0
    %501 = vmatpush1.msra.mxu0 0.0
    %502 = vmatprep.subr.mxu0 0.0
    %503 = vmatpush1.msra.mxu0 0.0
    %504 = vmatprep.subr.mxu0 0.0
    %505 = vmatpush1.msra.mxu0 0.0
    %506 = vmatprep.subr.mxu0 0.0
    %507 = vmatpush1.msra.mxu0 0.0
    %508 = vmatprep.subr.mxu0 0.0
    %509 = vmatpush1.msra.mxu0 0.0
    %510 = vmatprep.subr.mxu0 0.0
    %511 = vmatpush1.msra.mxu0 0.0
    %512 = vmatprep.subr.mxu0 0.0
    %513 = vmatpush1.msra.mxu0 0.0
    %514 = vmatprep.subr.mxu0 0.0
    %515 = vmatpush1.msra.mxu0 0.0
    %516 = vmatprep.subr.mxu0 0.0
    %517 = vmatpush1.msra.mxu0 0.0
    %518 = vmatprep.subr.mxu0 0.0
    %519 = vmatpush1.msra.mxu0 0.0
    %520 = vmatprep.mubr.f32.mxu0 0.0
    %521 = vmatmul.mubr.f32.gmra.mrb[0].mxu0 %v454
    %v522 = vpop.f32.mrb[0].mxu0
    %v523 = vadd.f32 %v451, %v522
    %v524 = vpop.f32.mrb[0].mxu0
    %525 = vdwg.mxu0
    %526 = vst [vmem:[#allocation3] sm:$0xf] %v523
    // Predicated region
    $region34: #{tpu_custom_call.1} parent=1 // pred_check
      _
    $region35: #{tpu_custom_call.1} parent=1 // pred_check_branch
      %528 = sbr.rel (0) target = $region37
    $region36: #{tpu_custom_call.1} parent=1 // pred_region
      %s530 = ssub.s32 64, 64
      %531 = vsyncadd [#allocation4], %s530
      %s533 = sshll.u32 [#allocation3], 4
      %s534 = int_to_ptr.vmem [resolvable:$true] %s533
      %536 = dma.vmem_to_hbm [thread:$0]  %s534, 64, %s8, [#allocation4]
    $region37: #{tpu_custom_call.1} parent=1 // pred_fallthru
      _
    // Predicated region
    $region38: #{tpu_custom_call.1} parent=1 // pred_check
      _
    $region39: #{tpu_custom_call.1} parent=1 // pred_check_branch
      %538 = sbr.rel (0) target = $region41
    $region40: #{tpu_custom_call.1} parent=1 // pred_region
      %539 = dma.done [#allocation4], 64
    $region41: #{tpu_custom_call.1} parent=1 // pred_fallthru
      _
    %540 = vsyncpa [#allocation4], 1

</llo_original>
